<compile_context>
chip_gen: v7x
topology: tpu7x:2x2x1
jax: 0.10.0
libtpu: 0.0.40
codegen_flags: <defaults>
</compile_context>

<pallas_src>
import jax
import jax.numpy as jnp
from jax.experimental import pallas as pl
from jax.experimental.pallas import tpu as pltpu

# SELU constants (match torch.nn.functional.selu)
_SELU_ALPHA = 1.6732632423543772
_SELU_SCALE = 1.0507009873554805


def _selu_core(x):
    # SELU without the leading scale; the scale is folded into the *next*
    # layer's weights in the wrapper.
    return jnp.where(x > 0, x, _SELU_ALPHA * (jnp.exp(x) - 1.0))


def _mlp_kernel(x_ref, w1_ref, b1_ref, w2t_ref, b2_ref, w3_ref, b3_ref, o_ref):
    # x_ref:   (1, Bt)  f32, batch on lanes
    # w1_ref:  (H, 1)   f32        b1_ref: (H, 1) f32
    # w2t_ref: (2H, H)  bf16, SELU scale pre-folded
    # b2_ref:  (2H, 1)  f32
    # w3_ref:  (2H, 1)  f32, SELU scale pre-folded
    # b3_ref:  (1, 1)   f32 scalar in SMEM
    x = x_ref[...]                                                   # (1, Bt)

    # Linear(1 -> H): degenerate K=1 matmul -> VPU broadcast outer product.
    h1 = _selu_core(w1_ref[...] * x + b1_ref[...])                   # (H, Bt)

    # Linear(H -> 2H): the only real contraction -> MXU, bf16 operands,
    # f32 accumulation (single pass, deterministic across TPU generations).
    z2 = jnp.dot(w2t_ref[...], h1.astype(jnp.bfloat16),
                 preferred_element_type=jnp.float32)                 # (2H, Bt)
    h2 = _selu_core(z2 + b2_ref[...])                                # (2H, Bt)

    # Linear(2H -> 1): degenerate N=1 matmul -> VPU mul + XLU sublane reduce.
    y = jnp.sum(h2 * w3_ref[...], axis=0, keepdims=True) + b3_ref[0, 0]

    o_ref[...] = y.astype(o_ref.dtype)                               # (1, Bt)


def linear_regression_forward(x, params, *, block_b=16384,
                              vmem_limit_bytes=48 * 1024 * 1024):
    """x: (B, 1) float32.  params: dict of w1,b1,w2,b2,w3,b3 (PyTorch (in,out) layout).

    Returns (B, 1) float32, matching the PyTorch module forward.
    vmem_limit_bytes=48 MiB is safe on v7x (64 MiB/TC); it may be raised to
    ~64-100 MiB on v5e/v6e (128 MiB) together with a larger block_b.
    """
    B = x.shape[0]
    H = params["w1"].shape[1]
    H2 = params["w2"].shape[1]

    # Lane-dense batch tiling.  Clamp the tile by the 128-rounded batch (small
    # problems stay one step) and by a VMEM-derived bound so the live f32/bf16
    # activation temporaries (~6*H*Bt*4 B) fit within half the scoped limit.
    B128 = pl.cdiv(B, 128) * 128
    max_bt_vmem = max(128, ((vmem_limit_bytes // 2) // (6 * H * 4)) // 128 * 128)
    block_b = max(128, min(block_b, B128, max_bt_vmem))
    grid = (pl.cdiv(B, block_b),)

    # Layout plumbing in the wrapper (no compute, no pad/copy of the batch):
    # batch on lanes, weights transposed to (out_features, in_features) columns,
    # SELU scale folded into the weights that consume the SELU outputs.
    x_row = x.reshape(1, B)                                         # free reshape
    w1c = params["w1"].T                                            # (H, 1)
    b1c = params["b1"].T                                            # (H, 1)
    w2t = (_SELU_SCALE * params["w2"]).T.astype(jnp.bfloat16)       # (2H, H) bf16
    b2c = params["b2"].T                                            # (2H, 1)
    w3c = _SELU_SCALE * params["w3"]                                # (2H, 1)
    b3 = params["b3"]                                               # (1, 1) -> SMEM

    def resident(shape):
        # Whole-array VMEM resident across all grid steps (constant index_map).
        return pl.BlockSpec(shape, lambda i: (0, 0))

    y_row = pl.pallas_call(
        _mlp_kernel,
        out_shape=jax.ShapeDtypeStruct((1, B), jnp.float32),
        grid_spec=pltpu.PrefetchScalarGridSpec(
            num_scalar_prefetch=0,
            grid=grid,
            in_specs=[
                pl.BlockSpec((1, block_b), lambda i: (0, i)),       # x tile
                resident((H, 1)),                                   # w1
                resident((H, 1)),                                   # b1
                resident((H2, H)),                                  # w2^T (bf16)
                resident((H2, 1)),                                  # b2
                resident((H2, 1)),                                  # w3
                pl.BlockSpec(memory_space=pltpu.MemorySpace.SMEM),  # b3 scalar
            ],
            out_specs=pl.BlockSpec((1, block_b), lambda i: (0, i)),
        ),
        compiler_params=pltpu.CompilerParams(
            dimension_semantics=("parallel",),
            vmem_limit_bytes=vmem_limit_bytes,
        ),
    )(x_row, w1c, b1c, w2t, b2c, w3c, b3)

    return y_row.reshape(B, 1)


def init_params(key, n_hidden_unit):
    """Deterministic synthetic init mimicking nn.Linear shapes (stored (in, out))."""
    H, H2 = n_hidden_unit, 2 * n_hidden_unit
    k1, k2, k3, k4, k5, k6 = jax.random.split(key, 6)
    return {
        "w1": jax.random.normal(k1, (1, H), jnp.float32) * 0.5,
        "b1": jax.random.normal(k2, (1, H), jnp.float32) * 0.1,
        "w2": jax.random.normal(k3, (H, H2), jnp.float32) * (1.0 / jnp.sqrt(H)),
        "b2": jax.random.normal(k4, (1, H2), jnp.float32) * 0.1,
        "w3": jax.random.normal(k5, (H2, 1), jnp.float32) * (1.0 / jnp.sqrt(H2)),
        "b3": jax.random.normal(k6, (1, 1), jnp.float32) * 0.1,
    }


def _selu_full(x):
    return _SELU_SCALE * jnp.where(x > 0, x, _SELU_ALPHA * (jnp.exp(x) - 1.0))


def _reference_forward_f32(x, p):
    # Pure-f32 reference matching the PyTorch module exactly.
    h1 = _selu_full(x @ p["w1"] + p["b1"])
    h2 = _selu_full(h1 @ p["w2"] + p["b2"])
    return h2 @ p["w3"] + p["b3"]


def _reference_forward_bf16(x, p):
    # Mirrors the kernel's numerics: SELU scale folded into w2/w3, bf16 MXU
    # operands for the middle contraction, f32 accumulation.
    h1u = _selu_core(x @ p["w1"] + p["b1"])
    w2f = (_SELU_SCALE * p["w2"]).astype(jnp.bfloat16)
    z2 = jnp.dot(h1u.astype(jnp.bfloat16), w2f,
                 preferred_element_type=jnp.float32) + p["b2"]
    h2u = _selu_core(z2)
    return h2u @ (_SELU_SCALE * p["w3"]) + p["b3"]


if __name__ == "__main__":
    key = jax.random.PRNGKey(0)
    kx, kp = jax.random.split(key)

    n_hidden_unit = 32
    batch = 8
    x = jax.random.normal(kx, (batch, 1), jnp.float32)
    params = init_params(kp, n_hidden_unit)

    out = jax.block_until_ready(linear_regression_forward(x, params))
    assert out.shape == (batch, 1)

    # Tight check against a reference that mirrors the kernel's bf16 MXU path.
    ref_bf16 = _reference_forward_bf16(x, params)
    assert jnp.allclose(out, ref_bf16, atol=1e-3, rtol=1e-3)

    # Loose check against the pure-f32 PyTorch-equivalent forward (bf16 MXU
    # operands introduce ~0.2-0.4% relative error; accumulation stays f32).
    ref_f32 = _reference_forward_f32(x, params)
    assert jnp.allclose(out, ref_f32, atol=2e-2, rtol=2e-2)

    print("KERNEL_OK")
</pallas_src>

<mosaic_0001>
module attributes {stable_mosaic.version = 11 : i64} {
  func.func @_mlp_kernel(%arg0: i32, %arg1: memref<1x128xf32, #tpu.memory_space<vmem>>, %arg2: memref<32x1xf32, #tpu.memory_space<vmem>>, %arg3: memref<32x1xf32, #tpu.memory_space<vmem>>, %arg4: memref<64x32xbf16, #tpu.memory_space<vmem>>, %arg5: memref<64x1xf32, #tpu.memory_space<vmem>>, %arg6: memref<64x1xf32, #tpu.memory_space<vmem>>, %arg7: memref<1x1xf32, #tpu.memory_space<smem>>, %arg8: memref<1x128xf32, #tpu.memory_space<vmem>>) attributes {dimension_semantics = [#tpu.dimension_semantics<parallel>], iteration_bounds = array<i64: 1>, scalar_prefetch = 0 : i64, scratch_operands = 0 : i64, tpu.core_type = #tpu.core_type<tc>, window_params = [{transform_indices = @transform_0, window_bounds = array<i64: 1, 128>}, {pipeline_mode = #tpu.pipeline_mode<synchronous>, transform_indices = @transform_1, window_bounds = array<i64: 32, 1>}, {pipeline_mode = #tpu.pipeline_mode<synchronous>, transform_indices = @transform_2, window_bounds = array<i64: 32, 1>}, {pipeline_mode = #tpu.pipeline_mode<synchronous>, transform_indices = @transform_3, window_bounds = array<i64: 64, 32>}, {pipeline_mode = #tpu.pipeline_mode<synchronous>, transform_indices = @transform_4, window_bounds = array<i64: 64, 1>}, {pipeline_mode = #tpu.pipeline_mode<synchronous>, transform_indices = @transform_5, window_bounds = array<i64: 64, 1>}, {transform_indices = @transform_6, window_bounds = array<i64: 1, 1>}, {transform_indices = @transform_7, window_bounds = array<i64: 1, 128>}]} {
    %c0 = arith.constant 0 : index
    %c0_0 = arith.constant 0 : index
    %0 = vector.load %arg1[%c0, %c0_0] : memref<1x128xf32, #tpu.memory_space<vmem>>, vector<1x128xf32>
    %c0_1 = arith.constant 0 : index
    %c0_2 = arith.constant 0 : index
    %1 = vector.load %arg2[%c0_1, %c0_2] : memref<32x1xf32, #tpu.memory_space<vmem>>, vector<32x1xf32>
    %2 = vector.broadcast %1 : vector<32x1xf32> to vector<32x128xf32>
    %3 = vector.broadcast %0 : vector<1x128xf32> to vector<32x128xf32>
    %4 = arith.mulf %2, %3 : vector<32x128xf32>
    %c0_3 = arith.constant 0 : index
    %c0_4 = arith.constant 0 : index
    %5 = vector.load %arg3[%c0_3, %c0_4] : memref<32x1xf32, #tpu.memory_space<vmem>>, vector<32x1xf32>
    %6 = vector.broadcast %5 : vector<32x1xf32> to vector<32x128xf32>
    %7 = arith.addf %4, %6 : vector<32x128xf32>
    %cst = arith.constant 0.000000e+00 : f32
    %8 = vector.broadcast %cst : f32 to vector<32x128xf32>
    %9 = arith.cmpf ogt, %7, %8 : vector<32x128xf32>
    %10 = math.exp %7 : vector<32x128xf32>
    %cst_5 = arith.constant 1.000000e+00 : f32
    %11 = vector.broadcast %cst_5 : f32 to vector<32x128xf32>
    %12 = arith.subf %10, %11 : vector<32x128xf32>
    %cst_6 = arith.constant 1.67326319 : f32
    %13 = vector.broadcast %cst_6 : f32 to vector<32x128xf32>
    %14 = arith.mulf %13, %12 : vector<32x128xf32>
    %15 = arith.select %9, %7, %14 : vector<32x128xi1>, vector<32x128xf32>
    %c0_7 = arith.constant 0 : index
    %c0_8 = arith.constant 0 : index
    %16 = vector.load %arg4[%c0_7, %c0_8] : memref<64x32xbf16, #tpu.memory_space<vmem>>, vector<64x32xbf16>
    %17 = arith.truncf %15 : vector<32x128xf32> to vector<32x128xbf16>
    %cst_9 = arith.constant dense<0.000000e+00> : vector<64x128xf32>
    %18 = tpu.matmul %16, %17, %cst_9 {dimension_numbers = #tpu.dot_dimension_numbers<[1], [0], [0], [1], [0, 0, 1, 1], [], []>} : vector<64x32xbf16>, vector<32x128xbf16>, vector<64x128xf32> -> vector<64x128xf32>
    %c0_10 = arith.constant 0 : index
    %c0_11 = arith.constant 0 : index
    %19 = vector.load %arg5[%c0_10, %c0_11] : memref<64x1xf32, #tpu.memory_space<vmem>>, vector<64x1xf32>
    %20 = vector.broadcast %19 : vector<64x1xf32> to vector<64x128xf32>
    %21 = arith.addf %18, %20 : vector<64x128xf32>
    %cst_12 = arith.constant 0.000000e+00 : f32
    %22 = vector.broadcast %cst_12 : f32 to vector<64x128xf32>
    %23 = arith.cmpf ogt, %21, %22 : vector<64x128xf32>
    %24 = math.exp %21 : vector<64x128xf32>
    %cst_13 = arith.constant 1.000000e+00 : f32
    %25 = vector.broadcast %cst_13 : f32 to vector<64x128xf32>
    %26 = arith.subf %24, %25 : vector<64x128xf32>
    %cst_14 = arith.constant 1.67326319 : f32
    %27 = vector.broadcast %cst_14 : f32 to vector<64x128xf32>
    %28 = arith.mulf %27, %26 : vector<64x128xf32>
    %29 = arith.select %23, %21, %28 : vector<64x128xi1>, vector<64x128xf32>
    %c0_15 = arith.constant 0 : index
    %c0_16 = arith.constant 0 : index
    %30 = vector.load %arg6[%c0_15, %c0_16] : memref<64x1xf32, #tpu.memory_space<vmem>>, vector<64x1xf32>
    %31 = vector.broadcast %30 : vector<64x1xf32> to vector<64x128xf32>
    %32 = arith.mulf %29, %31 : vector<64x128xf32>
    %cst_17 = arith.constant dense<0.000000e+00> : vector<128xf32>
    %33 = vector.multi_reduction <add>, %32, %cst_17 [0] : vector<64x128xf32> to vector<128xf32>
    %34 = vector.shape_cast %33 : vector<128xf32> to vector<1x128xf32>
    %c0_18 = arith.constant 0 : index
    %c0_19 = arith.constant 0 : index
    %35 = memref.load %arg7[%c0_18, %c0_19] : memref<1x1xf32, #tpu.memory_space<smem>>
    %36 = vector.broadcast %35 : f32 to vector<1x128xf32>
    %37 = arith.addf %34, %36 : vector<1x128xf32>
    %c0_20 = arith.constant 0 : index
    %c0_21 = arith.constant 0 : index
    %38 = vector.load %arg8[%c0_20, %c0_21] : memref<1x128xf32, #tpu.memory_space<vmem>>, vector<1x128xf32>
    tpu.vector_store %arg8[%c0_20, %c0_21], %37 {strides = array<i32>} : memref<1x128xf32, #tpu.memory_space<vmem>>, vector<1x128xf32>,
    return
  }
  func.func @transform_0(%arg0: i32) -> (i32, i32) {
    %c0_i32 = arith.constant 0 : i32
    %c0_i32_0 = arith.constant 0 : i32
    return %c0_i32, %arg0 : i32, i32
  }
  func.func @transform_1(%arg0: i32) -> (i32, i32) {
    %c0_i32 = arith.constant 0 : i32
    %c0_i32_0 = arith.constant 0 : i32
    %c0_i32_1 = arith.constant 0 : i32
    return %c0_i32, %c0_i32_0 : i32, i32
  }
  func.func @transform_2(%arg0: i32) -> (i32, i32) {
    %c0_i32 = arith.constant 0 : i32
    %c0_i32_0 = arith.constant 0 : i32
    %c0_i32_1 = arith.constant 0 : i32
    return %c0_i32, %c0_i32_0 : i32, i32
  }
  func.func @transform_3(%arg0: i32) -> (i32, i32) {
    %c0_i32 = arith.constant 0 : i32
    %c0_i32_0 = arith.constant 0 : i32
    %c0_i32_1 = arith.constant 0 : i32
    return %c0_i32, %c0_i32_0 : i32, i32
  }
  func.func @transform_4(%arg0: i32) -> (i32, i32) {
    %c0_i32 = arith.constant 0 : i32
    %c0_i32_0 = arith.constant 0 : i32
    %c0_i32_1 = arith.constant 0 : i32
    return %c0_i32, %c0_i32_0 : i32, i32
  }
  func.func @transform_5(%arg0: i32) -> (i32, i32) {
    %c0_i32 = arith.constant 0 : i32
    %c0_i32_0 = arith.constant 0 : i32
    %c0_i32_1 = arith.constant 0 : i32
    return %c0_i32, %c0_i32_0 : i32, i32
  }
  func.func @transform_6(%arg0: i32) -> (i32, i32) {
    %c0_i32 = arith.constant 0 : i32
    %c0_i32_0 = arith.constant 0 : i32
    %c0_i32_1 = arith.constant 0 : i32
    return %c0_i32, %c0_i32_0 : i32, i32
  }
  func.func @transform_7(%arg0: i32) -> (i32, i32) {
    %c0_i32 = arith.constant 0 : i32
    %c0_i32_0 = arith.constant 0 : i32
    return %c0_i32, %arg0 : i32, i32
  }
}

</mosaic_0001>

<llo_original>
// kernel: tpu_custom_call.1
$region0: #{tpu_custom_call.1}
  #allocation0 [shape = 'u32[]', space=smem, size = 0x4, offset = 0x4, fixed_abs, tag = 'smem constant byte address 0x4 - core index']
  #allocation1 [shape = 'u32[144,128]{1,0:T(1,128)}', space=vmem, size = 0x12000, scoped, tag = 'internal scratch']
  #allocation2 [shape = 'f32[1,1]{1,0:T(1,128)S(6)}', space=smem, size = 0x200, scoped, tag = 'scoped memory for tpu_custom_call.1']
  %s0 = inlined_call_operand.vmem [shape: f32[1,8], index: 0, kind: input, shape index: {}]
  %s1 = inlined_call_operand.vmem [shape: f32[32,1], index: 1, kind: input, shape index: {}]
  %s2 = inlined_call_operand.vmem [shape: f32[32,1], index: 2, kind: input, shape index: {}]
  %s3 = inlined_call_operand.vmem [shape: bf16[64,32], index: 3, kind: input, shape index: {}]
  %s4 = inlined_call_operand.vmem [shape: f32[64,1], index: 4, kind: input, shape index: {}]
  %s5 = inlined_call_operand.vmem [shape: f32[64,1], index: 5, kind: input, shape index: {}]
  %s6 = inlined_call_operand.<no memory space> [shape: f32[1,1], index: 6, kind: input, shape index: {}]
  %s7 = inlined_call_operand.hbm [shape: f32[1,8], index: 7, kind: output, shape index: {}]
  %s8 = sld [smem:[#allocation0]]
  $region38: #{tpu_custom_call.1} parent=0
    _
  %s10 = ssub.s32 1, %s8
  %s11 = scalar_select 0, %s10, %s8
  %12 = sst [smem:[#allocation2]] %s6
  $region1: #{tpu_custom_call.1} parent=0
    #allocation3 [shape = 'u8[512]{0}', space=vmem, size = 0x400, scoped, tag = 'output window, operand 0, single buffered']
    #allocation4 [shape = 's32[1]{0}', space=sflag, size = 0x4, scoped, tag = 'scoped memory for tpu_custom_call.1']
    %13 = vsyncpa [#allocation4], 0
    // Predicated region
    $region2: #{tpu_custom_call.1} parent=1 // pred_check
      _
    $region3: #{tpu_custom_call.1} parent=1 // pred_check_branch
      %15 = sbr.rel (0) target = $region5
    $region4: #{tpu_custom_call.1} parent=1 // pred_region
      _
    $region5: #{tpu_custom_call.1} parent=1 // pred_fallthru
      _
    // Predicated region
    $region6: #{tpu_custom_call.1} parent=1 // pred_check
      _
    $region7: #{tpu_custom_call.1} parent=1 // pred_check_branch
      %17 = sbr.rel (0) target = $region9
    $region8: #{tpu_custom_call.1} parent=1 // pred_region
      _
    $region9: #{tpu_custom_call.1} parent=1 // pred_fallthru
      _
    // Predicated region
    $region10: #{tpu_custom_call.1} parent=1 // pred_check
      _
    $region11: #{tpu_custom_call.1} parent=1 // pred_check_branch
      %19 = sbr.rel (0) target = $region13
    $region12: #{tpu_custom_call.1} parent=1 // pred_region
      _
    $region13: #{tpu_custom_call.1} parent=1 // pred_fallthru
      _
    // Predicated region
    $region14: #{tpu_custom_call.1} parent=1 // pred_check
      _
    $region15: #{tpu_custom_call.1} parent=1 // pred_check_branch
      %21 = sbr.rel (0) target = $region17
    $region16: #{tpu_custom_call.1} parent=1 // pred_region
      _
    $region17: #{tpu_custom_call.1} parent=1 // pred_fallthru
      _
    // Predicated region
    $region18: #{tpu_custom_call.1} parent=1 // pred_check
      _
    $region19: #{tpu_custom_call.1} parent=1 // pred_check_branch
      %23 = sbr.rel (0) target = $region21
    $region20: #{tpu_custom_call.1} parent=1 // pred_region
      _
    $region21: #{tpu_custom_call.1} parent=1 // pred_fallthru
      _
    // Predicated region
    $region22: #{tpu_custom_call.1} parent=1 // pred_check
      _
    $region23: #{tpu_custom_call.1} parent=1 // pred_check_branch
      %25 = sbr.rel (0) target = $region25
    $region24: #{tpu_custom_call.1} parent=1 // pred_region
      _
    $region25: #{tpu_custom_call.1} parent=1 // pred_fallthru
      _
    // Predicated region
    $region26: #{tpu_custom_call.1} parent=1 // pred_check
      _
    $region27: #{tpu_custom_call.1} parent=1 // pred_check_branch
      %27 = sbr.rel (0) target = $region29
    $region28: #{tpu_custom_call.1} parent=1 // pred_region
      _
    $region29: #{tpu_custom_call.1} parent=1 // pred_fallthru
      _
    %v29 = vld [vmem:[%s0] sm:$0x1]
    %v30 = vld [vmem:[%s1] sm:$0xff]
    %v31 = vld [vmem:[%s1 + $0x8] sm:$0xff]
    %v32 = vld [vmem:[%s1 + $0x10] sm:$0xff]
    %v33 = vld [vmem:[%s1 + $0x18] sm:$0xff]
    %35 = vset.pattern.permute.xlu0 0
    %36 = vperm.xlu0 %35, %v30
    %v37 = vpop.permute.xlu0 %36
    %40 = vset.pattern.permute.xlu0 0
    %41 = vperm.xlu0 %40, %v31
    %v42 = vpop.permute.xlu0 %41
    %45 = vset.pattern.permute.xlu0 0
    %46 = vperm.xlu0 %45, %v32
    %v47 = vpop.permute.xlu0 %46
    %50 = vset.pattern.permute.xlu0 0
    %51 = vperm.xlu0 %50, %v33
    %v52 = vpop.permute.xlu0 %51
    %v55 = vlaneseq
    %v56 = vshrl.u32 %v55, 7
    %v57 = vsub.s32 0, %v56
    %v58 = vrot.slane %v29, %v57
    %v60 = vmul.f32 %v37, %v58
    %v61 = vmul.f32 %v42, %v58
    %v62 = vmul.f32 %v47, %v58
    %v63 = vmul.f32 %v52, %v58
    %v64 = vld [vmem:[%s2] sm:$0xff]
    %v65 = vld [vmem:[%s2 + $0x8] sm:$0xff]
    %v66 = vld [vmem:[%s2 + $0x10] sm:$0xff]
    %v67 = vld [vmem:[%s2 + $0x18] sm:$0xff]
    %69 = vset.pattern.permute.xlu0 0
    %70 = vperm.xlu0 %69, %v64
    %v71 = vpop.permute.xlu0 %70
    %74 = vset.pattern.permute.xlu0 0
    %75 = vperm.xlu0 %74, %v65
    %v76 = vpop.permute.xlu0 %75
    %79 = vset.pattern.permute.xlu0 0
    %80 = vperm.xlu0 %79, %v66
    %v81 = vpop.permute.xlu0 %80
    %84 = vset.pattern.permute.xlu0 0
    %85 = vperm.xlu0 %84, %v67
    %v86 = vpop.permute.xlu0 %85
    %v88 = vadd.f32 %v60, %v71
    %v89 = vadd.f32 %v61, %v76
    %v90 = vadd.f32 %v62, %v81
    %v91 = vadd.f32 %v63, %v86
    %vm92 = vcmp.gt.f32.partialorder %v88, 0.0
    %vm93 = vcmp.gt.f32.partialorder %v89, 0.0
    %vm94 = vcmp.gt.f32.partialorder %v90, 0.0
    %vm95 = vcmp.gt.f32.partialorder %v91, 0.0
    %v96 = vmul.f32 %v88, 1.442695
    %v97 = vpow.pop %v96
    %v98 = vmul.f32 %v89, 1.442695
    %v99 = vpow.pop %v98
    %v100 = vmul.f32 %v90, 1.442695
    %v101 = vpow.pop %v100
    %v102 = vmul.f32 %v91, 1.442695
    %v103 = vpow.pop %v102
    %v104 = vsub.f32 %v97, 1.0
    %v105 = vsub.f32 %v99, 1.0
    %v106 = vsub.f32 %v101, 1.0
    %v107 = vsub.f32 %v103, 1.0
    %v108 = vmul.f32 %v104, 1.6732632
    %v109 = vmul.f32 %v105, 1.6732632
    %v110 = vmul.f32 %v106, 1.6732632
    %v111 = vmul.f32 %v107, 1.6732632
    %v112 = vsel %vm92, %v88, %v108
    %v113 = vsel %vm93, %v89, %v109
    %v114 = vsel %vm94, %v90, %v110
    %v115 = vsel %vm95, %v91, %v111
    %v116 = vld [vmem:[%s3] sm:$0xf]
    %v117 = vld [vmem:[%s3 + $0x4] sm:$0xf]
    %v118 = vld [vmem:[%s3 + $0x8] sm:$0xf]
    %v119 = vld [vmem:[%s3 + $0xc] sm:$0xf]
    %v120 = vld [vmem:[%s3 + $0x10] sm:$0xf]
    %v121 = vld [vmem:[%s3 + $0x14] sm:$0xf]
    %v122 = vld [vmem:[%s3 + $0x18] sm:$0xf]
    %v123 = vld [vmem:[%s3 + $0x1c] sm:$0xf]
    %v124 = vpack.c.bf16 %v113, %v112
    %v125 = vpack.c.bf16 %v115, %v114
    %v126 = vld [vmem:[%s4] sm:$0xff]
    %v127 = vld [vmem:[%s4 + $0x8] sm:$0xff]
    %v128 = vld [vmem:[%s4 + $0x10] sm:$0xff]
    %v129 = vld [vmem:[%s4 + $0x18] sm:$0xff]
    %v130 = vld [vmem:[%s4 + $0x20] sm:$0xff]
    %v131 = vld [vmem:[%s4 + $0x28] sm:$0xff]
    %v132 = vld [vmem:[%s4 + $0x30] sm:$0xff]
    %v133 = vld [vmem:[%s4 + $0x38] sm:$0xff]
    %135 = vset.pattern.permute.xlu0 0
    %136 = vperm.xlu0 %135, %v126
    %v137 = vpop.permute.xlu0 %136
    %140 = vset.pattern.permute.xlu0 0
    %141 = vperm.xlu0 %140, %v127
    %v142 = vpop.permute.xlu0 %141
    %145 = vset.pattern.permute.xlu0 0
    %146 = vperm.xlu0 %145, %v128
    %v147 = vpop.permute.xlu0 %146
    %150 = vset.pattern.permute.xlu0 0
    %151 = vperm.xlu0 %150, %v129
    %v152 = vpop.permute.xlu0 %151
    %155 = vset.pattern.permute.xlu0 0
    %156 = vperm.xlu0 %155, %v130
    %v157 = vpop.permute.xlu0 %156
    %160 = vset.pattern.permute.xlu0 0
    %161 = vperm.xlu0 %160, %v131
    %v162 = vpop.permute.xlu0 %161
    %165 = vset.pattern.permute.xlu0 0
    %166 = vperm.xlu0 %165, %v132
    %v167 = vpop.permute.xlu0 %166
    %170 = vset.pattern.permute.xlu0 0
    %171 = vperm.xlu0 %170, %v133
    %v172 = vpop.permute.xlu0 %171
    %v182 = vunpack.c.l.b16 %v116
    %v183 = vunpack.c.l.b16 %v117
    %v184 = vunpack.c.l.b16 %v118
    %v185 = vunpack.c.l.b16 %v119
    %v186 = vunpack.c.l.b16 %v120
    %v187 = vunpack.c.l.b16 %v121
    %v188 = vunpack.c.l.b16 %v122
    %v189 = vunpack.c.l.b16 %v123
    %v190 = vpack.c.b16 %v183, %v182
    %v191 = vpack.c.b16 %v185, %v184
    %v192 = vpack.c.b16 %v187, %v186
    %v193 = vpack.c.b16 %v189, %v188
    %vm194 = vcmask 261120
    %v196 = vsel %vm194, %v190, 0
    %v199 = vsel %vm194, %v191, 0
    %v202 = vsel %vm194, %v192, 0
    %v205 = vsel %vm194, %v193, 0
    %207 = vmatprep.subr.bf16.mxu0 0
    %208 = vmatpush1.bf16.msra.mxu0 %v124
    %209 = vmatprep.subr.bf16.mxu0 0
    %210 = vmatpush1.bf16.msra.mxu0 %v125
    %211 = vmatprep.subr.bf16.mxu0 0
    %212 = vmatpush1.bf16.msra.mxu0 0
    %213 = vmatprep.subr.bf16.mxu0 0
    %214 = vmatpush1.bf16.msra.mxu0 0
    %215 = vmatprep.subr.bf16.mxu0 0
    %216 = vmatpush1.bf16.msra.mxu0 0
    %217 = vmatprep.subr.bf16.mxu0 0
    %218 = vmatpush1.bf16.msra.mxu0 0
    %219 = vmatprep.subr.bf16.mxu0 0
    %220 = vmatpush1.bf16.msra.mxu0 0
    %221 = vmatprep.subr.bf16.mxu0 0
    %222 = vmatpush1.bf16.msra.mxu0 0
    %223 = vmatprep.subr.bf16.mxu0 0
    %224 = vmatpush1.bf16.msra.mxu0 0
    %225 = vmatprep.subr.bf16.mxu0 0
    %226 = vmatpush1.bf16.msra.mxu0 0
    %227 = vmatprep.subr.bf16.mxu0 0
    %228 = vmatpush1.bf16.msra.mxu0 0
    %229 = vmatprep.subr.bf16.mxu0 0
    %230 = vmatpush1.bf16.msra.mxu0 0
    %231 = vmatprep.subr.bf16.mxu0 0
    %232 = vmatpush1.bf16.msra.mxu0 0
    %233 = vmatprep.subr.bf16.mxu0 0
    %234 = vmatpush1.bf16.msra.mxu0 0
    %235 = vmatprep.subr.bf16.mxu0 0
    %236 = vmatpush1.bf16.msra.mxu0 0
    %237 = vmatprep.subr.bf16.mxu0 0
    %238 = vmatpush1.bf16.msra.mxu0 0
    %239 = vmatprep.mubr.bf16.mxu0 0
    %240 = vmatmul.mubr.bf16.gmra.mrb[0].mxu0 %v196
    %v241 = vpop.f32.mrb[0].mxu0
    %v242 = vadd.f32 %v137, %v241
    %v243 = vpop.f32.mrb[0].mxu0
    %v244 = vpop.f32.mrb[0].mxu0
    %v245 = vadd.f32 %v142, %v244
    %v246 = vpop.f32.mrb[0].mxu0
    %247 = vmatprep.mubr.bf16.mxu0 0
    %248 = vmatmul.mubr.bf16.gmra.mrb[0].mxu0 %v199
    %v249 = vpop.f32.mrb[0].mxu0
    %v250 = vadd.f32 %v147, %v249
    %v251 = vpop.f32.mrb[0].mxu0
    %v252 = vpop.f32.mrb[0].mxu0
    %v253 = vadd.f32 %v152, %v252
    %v254 = vpop.f32.mrb[0].mxu0
    %255 = vmatprep.mubr.bf16.mxu0 0
    %256 = vmatmul.mubr.bf16.gmra.mrb[0].mxu0 %v202
    %v257 = vpop.f32.mrb[0].mxu0
    %v258 = vadd.f32 %v157, %v257
    %v259 = vpop.f32.mrb[0].mxu0
    %v260 = vpop.f32.mrb[0].mxu0
    %v261 = vadd.f32 %v162, %v260
    %v262 = vpop.f32.mrb[0].mxu0
    %263 = vmatprep.mubr.bf16.mxu0 0
    %264 = vmatmul.mubr.bf16.gmra.mrb[0].mxu0 %v205
    %v265 = vpop.f32.mrb[0].mxu0
    %v266 = vadd.f32 %v167, %v265
    %v267 = vpop.f32.mrb[0].mxu0
    %v268 = vpop.f32.mrb[0].mxu0
    %v269 = vadd.f32 %v172, %v268
    %v270 = vpop.f32.mrb[0].mxu0
    %271 = vdwg.mxu0
    %vm272 = vcmp.gt.f32.partialorder %v242, 0.0
    %vm273 = vcmp.gt.f32.partialorder %v245, 0.0
    %vm274 = vcmp.gt.f32.partialorder %v250, 0.0
    %vm275 = vcmp.gt.f32.partialorder %v253, 0.0
    %vm276 = vcmp.gt.f32.partialorder %v258, 0.0
    %vm277 = vcmp.gt.f32.partialorder %v261, 0.0
    %vm278 = vcmp.gt.f32.partialorder %v266, 0.0
    %vm279 = vcmp.gt.f32.partialorder %v269, 0.0
    %v280 = vmul.f32 %v242, 1.442695
    %v281 = vpow.pop %v280
    %v282 = vmul.f32 %v245, 1.442695
    %v283 = vpow.pop %v282
    %v284 = vmul.f32 %v250, 1.442695
    %v285 = vpow.pop %v284
    %v286 = vmul.f32 %v253, 1.442695
    %v287 = vpow.pop %v286
    %v288 = vmul.f32 %v258, 1.442695
    %v289 = vpow.pop %v288
    %v290 = vmul.f32 %v261, 1.442695
    %v291 = vpow.pop %v290
    %v292 = vmul.f32 %v266, 1.442695
    %v293 = vpow.pop %v292
    %v294 = vmul.f32 %v269, 1.442695
    %v295 = vpow.pop %v294
    %v296 = vsub.f32 %v281, 1.0
    %v297 = vsub.f32 %v283, 1.0
    %v298 = vsub.f32 %v285, 1.0
    %v299 = vsub.f32 %v287, 1.0
    %v300 = vsub.f32 %v289, 1.0
    %v301 = vsub.f32 %v291, 1.0
    %v302 = vsub.f32 %v293, 1.0
    %v303 = vsub.f32 %v295, 1.0
    %v304 = vmul.f32 %v296, 1.6732632
    %v305 = vmul.f32 %v297, 1.6732632
    %v306 = vmul.f32 %v298, 1.6732632
    %v307 = vmul.f32 %v299, 1.6732632
    %v308 = vmul.f32 %v300, 1.6732632
    %v309 = vmul.f32 %v301, 1.6732632
    %v310 = vmul.f32 %v302, 1.6732632
    %v311 = vmul.f32 %v303, 1.6732632
    %v312 = vsel %vm272, %v242, %v304
    %v313 = vsel %vm273, %v245, %v305
    %v314 = vsel %vm274, %v250, %v306
    %v315 = vsel %vm275, %v253, %v307
    %v316 = vsel %vm276, %v258, %v308
    %v317 = vsel %vm277, %v261, %v309
    %v318 = vsel %vm278, %v266, %v310
    %v319 = vsel %vm279, %v269, %v311
    %v320 = vld [vmem:[%s5] sm:$0xff]
    %v321 = vld [vmem:[%s5 + $0x8] sm:$0xff]
    %v322 = vld [vmem:[%s5 + $0x10] sm:$0xff]
    %v323 = vld [vmem:[%s5 + $0x18] sm:$0xff]
    %v324 = vld [vmem:[%s5 + $0x20] sm:$0xff]
    %v325 = vld [vmem:[%s5 + $0x28] sm:$0xff]
    %v326 = vld [vmem:[%s5 + $0x30] sm:$0xff]
    %v327 = vld [vmem:[%s5 + $0x38] sm:$0xff]
    %329 = vset.pattern.permute.xlu0 0
    %330 = vperm.xlu0 %329, %v320
    %v331 = vpop.permute.xlu0 %330
    %334 = vset.pattern.permute.xlu0 0
    %335 = vperm.xlu0 %334, %v321
    %v336 = vpop.permute.xlu0 %335
    %339 = vset.pattern.permute.xlu0 0
    %340 = vperm.xlu0 %339, %v322
    %v341 = vpop.permute.xlu0 %340
    %344 = vset.pattern.permute.xlu0 0
    %345 = vperm.xlu0 %344, %v323
    %v346 = vpop.permute.xlu0 %345
    %349 = vset.pattern.permute.xlu0 0
    %350 = vperm.xlu0 %349, %v324
    %v351 = vpop.permute.xlu0 %350
    %354 = vset.pattern.permute.xlu0 0
    %355 = vperm.xlu0 %354, %v325
    %v356 = vpop.permute.xlu0 %355
    %359 = vset.pattern.permute.xlu0 0
    %360 = vperm.xlu0 %359, %v326
    %v361 = vpop.permute.xlu0 %360
    %364 = vset.pattern.permute.xlu0 0
    %365 = vperm.xlu0 %364, %v327
    %v366 = vpop.permute.xlu0 %365
    %v368 = vmul.f32 %v312, %v331
    %v369 = vmul.f32 %v313, %v336
    %v370 = vmul.f32 %v314, %v341
    %v371 = vmul.f32 %v315, %v346
    %v372 = vmul.f32 %v316, %v351
    %v373 = vmul.f32 %v317, %v356
    %v374 = vmul.f32 %v318, %v361
    %v375 = vmul.f32 %v319, %v366
    %v376 = vadd.f32 %v368, %v369
    %v377 = vadd.f32 %v376, %v370
    %v378 = vadd.f32 %v377, %v371
    %v379 = vadd.f32 %v378, %v372
    %v380 = vadd.f32 %v379, %v373
    %v381 = vadd.f32 %v380, %v374
    %v382 = vadd.f32 %v381, %v375
    %v383 = vrot.slane %v382, 4
    %v384 = vadd.f32 %v382, %v383
    %v385 = vrot.slane %v384, 2
    %v386 = vadd.f32 %v384, %v385
    %v387 = vrot.slane %v386, 1
    %v388 = vadd.f32 %v386, %v387
    %s389 = sld [smem:[#allocation2]]
    %v390 = vstv %s389
    %v391 = vadd.f32 %v388, %v390
    %392 = vst [vmem:[#allocation3] sm:$0x1] %v391
    // Predicated region
    $region30: #{tpu_custom_call.1} parent=1 // pred_check
      _
    $region31: #{tpu_custom_call.1} parent=1 // pred_check_branch
      %394 = sbr.rel (0) target = $region33
    $region32: #{tpu_custom_call.1} parent=1 // pred_region
      %s396 = ssub.s32 16, 16
      %397 = vsyncadd [#allocation4], %s396
      %s399 = sshll.u32 [#allocation3], 4
      %s400 = int_to_ptr.vmem [resolvable:$true] %s399
      %402 = dma.vmem_to_hbm [thread:$0]  %s400, 16, %s7, [#allocation4]
    $region33: #{tpu_custom_call.1} parent=1 // pred_fallthru
      _
    // Predicated region
    $region34: #{tpu_custom_call.1} parent=1 // pred_check
      _
    $region35: #{tpu_custom_call.1} parent=1 // pred_check_branch
      %404 = sbr.rel (0) target = $region37
    $region36: #{tpu_custom_call.1} parent=1 // pred_region
      %405 = dma.done [#allocation4], 16
    $region37: #{tpu_custom_call.1} parent=1 // pred_fallthru
      _
    %406 = vsyncpa [#allocation4], 1

</llo_original>
